<compile_context>
chip_gen: v5e
topology: v5e:2x2
jax: 0.10.0
libtpu: 0.0.40
codegen_flags: <defaults>
</compile_context>

<pallas_src>
import numpy as np
import jax
import jax.numpy as jnp
from jax.experimental import pallas as pl
from jax.experimental.pallas import tpu as pltpu


def _ceil_div(a, b):
    return -(-a // b)


def _ordl_kernel(feat_ref, centers_ref, c2_ref, ones_ref, labels_ref, params_ref,
                 logits_ref, stats_ref,
                 ce_acc, open_acc, kk_acc, uk_acc, pos_acc):
    TB, D = feat_ref.shape
    C = centers_ref.shape[0]
    K = C - 1                                   # known classes

    ki = pl.program_id(1)                       # inner (reduction) axis
    last = pl.num_programs(1) - 1

    r1 = params_ref[0]                          # radius1
    r2 = params_ref[1]                          # radius2

    inv_d = jnp.float32(1.0 / D)
    scale = jnp.float32(1.0 + 2.0 / D)

    @pl.when(ki == 0)
    def _init():
        ce_acc[...] = jnp.zeros_like(ce_acc)
        open_acc[...] = jnp.zeros_like(open_acc)
        kk_acc[...] = jnp.zeros_like(kk_acc)
        uk_acc[...] = jnp.zeros_like(uk_acc)
        pos_acc[...] = jnp.zeros_like(pos_acc)

    f = feat_ref[...].astype(jnp.float32)       # (TB, D)  cast from native/bf16 here
    fsq = f * f

    # Single lane-dense MXU pass: batch on the lane axis everywhere.
    nt = (((1,), (1,)), ((), ()))               # contract last dims: A @ B^T
    dot_c = jax.lax.dot_general(centers_ref[...], f, nt,
                                preferred_element_type=jnp.float32)    # (C, TB)
    f2_row = jax.lax.dot_general(ones_ref[...], fsq, nt,
                                 preferred_element_type=jnp.float32)   # (1, TB)
    c2_col = c2_ref[...]                                               # (C, 1)

    # logits = dot - l2 ;  l2 = (||f||^2 - 2 dot + ||c||^2)/D
    #        = dot*(1 + 2/D) - (||f||^2 + ||c||^2)/D
    l_t = dot_c * scale - (f2_row + c2_col) * inv_d                    # (C, TB)
    logits_ref[...] = l_t.astype(logits_ref.dtype)                     # lane-dense store

    d_c = dot_c - l_t                            # (C, TB)  l2 distances (algebraic)
    d_k = d_c[:K]                                # (K, TB)  to known centers
    d_u = d_c[K:]                                # (1, TB)  to unknown center
    x = l_t[:K] - l_t[K:]                        # (K, TB)  l_class - l_unknown

    lbl = labels_ref[...]                        # (1, TB) int32, -1 = padded row
    cls = jax.lax.broadcasted_iota(jnp.int32, (K, TB), 0)
    pos = (lbl == cls).astype(jnp.float32)       # (K, TB) one-hot built in-kernel
    valid = (lbl >= 0).astype(jnp.float32)       # (1, TB)
    neg = valid - pos                            # (K, TB)

    # 2-class CE over [l_unknown, l_class] via closed-form softplus.
    z = (1.0 - 2.0 * pos) * x                    # +x for negatives, -x for positives
    ce = jnp.maximum(z, 0.0) + jnp.log(1.0 + jnp.exp(-jnp.abs(z)))

    # Raw per-class sums over this batch chunk (pure VPU elementwise, lane-dense).
    ce_acc[...] += ce * valid
    open_acc[...] += jnp.maximum(0.0, 1.0 + d_u - r1) * neg
    kk_acc[...] += jnp.maximum(0.0, 1.0 + d_k - r2) * pos
    uk_acc[...] += jnp.maximum(0.0, 1.0 + r2 - d_k) * neg
    pos_acc[...] += pos

    @pl.when(ki == last)
    def _flush():
        # Pack the five per-class partial sums into a lane-dense (K, 128) block
        # (cols 0..4 = ce, open, kk, uk, #pos).  Final means/mixing happen in JAX.
        cols = jax.lax.broadcasted_iota(jnp.int32, (K, 128), 1)
        ce_s = jnp.sum(ce_acc[...], axis=1, keepdims=True)
        op_s = jnp.sum(open_acc[...], axis=1, keepdims=True)
        kk_s = jnp.sum(kk_acc[...], axis=1, keepdims=True)
        uk_s = jnp.sum(uk_acc[...], axis=1, keepdims=True)
        np_s = jnp.sum(pos_acc[...], axis=1, keepdims=True)
        packed = jnp.where(cols == 0, ce_s,
                 jnp.where(cols == 1, op_s,
                 jnp.where(cols == 2, kk_s,
                 jnp.where(cols == 3, uk_s,
                 jnp.where(cols == 4, np_s, 0.0)))))
        stats_ref[0] = packed


def ordl_loss(feat, centers, radius1, radius2, labels, *, alpha, beta,
              tile_b=None, num_chunks=None, logits_dtype=None,
              vmem_budget_bytes=24 * 1024 * 1024):
    """Forward pass of OrdlLoss.  Returns (logits, loss, {'cla', 'ge'})."""
    feat = jnp.asarray(feat)
    if not jnp.issubdtype(feat.dtype, jnp.floating):
        feat = feat.astype(jnp.float32)
    centers = jnp.asarray(centers, jnp.float32)
    labels = jnp.asarray(labels, jnp.int32)
    B, D = feat.shape
    C, _ = centers.shape
    K = C - 1
    # TODO(synk): labels must lie in [0, K); a true-unknown label (>= K) would make
    # the PyTorch reference index out of range, so it is out of contract here too.

    if logits_dtype is None:
        logits_dtype = feat.dtype
    feat_bytes = jnp.dtype(feat.dtype).itemsize
    out_bytes = jnp.dtype(logits_dtype).itemsize

    # ---- tile size from a VMEM byte budget (generation-agnostic) ----
    per_row = 2 * D * feat_bytes + 2 * C * out_bytes + 2 * 4 + 5 * K * 4
    resident = 2 * (C * D * 4 + C * 4 + D * 4 + K * 128 * 4) + 4096
    if tile_b is None:
        cap_rows = max((vmem_budget_bytes - resident) // per_row, 128)
        tile_cap = int(min(2048, (cap_rows // 128) * 128))
        tile_cap = max(tile_cap, 128)
    else:
        if tile_b % 128 != 0:
            raise ValueError("tile_b must be a multiple of 128")
        tile_cap = int(tile_b)

    # ---- batch split: (n_par parallel chunks) x (n_inner sequential tiles) ----
    blocks_total = _ceil_div(B, 128)
    if num_chunks is None:
        n_par = 2 if blocks_total >= 2 else 1      # lets 2 TCs (v7x) split the batch
    else:
        n_par = max(1, int(num_chunks))
    blocks_per_chunk = _ceil_div(blocks_total, n_par)
    blocks_per_tile = max(1, min(tile_cap // 128, blocks_per_chunk))
    tile_b = blocks_per_tile * 128
    n_inner = _ceil_div(blocks_per_chunk, blocks_per_tile)
    b_pad = n_par * n_inner * tile_b

    if b_pad != B:
        feat = jnp.pad(feat, ((0, b_pad - B), (0, 0)))
        labels = jnp.pad(labels, (0, b_pad - B), constant_values=-1)
    labels2d = labels.reshape(1, b_pad)

    c2_col = jnp.sum(centers * centers, axis=1, keepdims=True)       # (C, 1), hoisted
    ones_row = jnp.ones((1, D), dtype=jnp.float32)                   # hoisted constant
    params = jnp.array([radius1, radius2], dtype=jnp.float32)

    cost = pl.CostEstimate(
        flops=int(2 * b_pad * D * (C + 1) + 30 * b_pad * K),
        transcendentals=int(2 * b_pad * K),
        bytes_accessed=int(b_pad * D * feat_bytes + b_pad * C * out_bytes
                           + b_pad * 4 + 4 * (C * D + C + D) + n_par * K * 128 * 4),
    )

    logits_t, stats = pl.pallas_call(
        _ordl_kernel,
        out_shape=(jax.ShapeDtypeStruct((C, b_pad), logits_dtype),
                   jax.ShapeDtypeStruct((n_par, K, 128), jnp.float32)),
        grid=(n_par, n_inner),
        in_specs=[
            pl.BlockSpec((tile_b, D), lambda p, k: (p * n_inner + k, 0)),   # feat tile
            pl.BlockSpec((C, D), lambda p, k: (0, 0)),                      # centers (resident)
            pl.BlockSpec((C, 1), lambda p, k: (0, 0)),                      # ||c||^2 (resident)
            pl.BlockSpec((1, D), lambda p, k: (0, 0)),                      # ones row (resident)
            pl.BlockSpec((1, tile_b), lambda p, k: (0, p * n_inner + k)),   # labels tile
            pl.BlockSpec(memory_space=pltpu.MemorySpace.SMEM),              # scalar params
        ],
        out_specs=(
            pl.BlockSpec((C, tile_b), lambda p, k: (0, p * n_inner + k)),   # logits^T tile
            pl.BlockSpec((1, K, 128), lambda p, k: (p, 0, 0)),              # partial sums / chunk
        ),
        scratch_shapes=[pltpu.VMEM((K, tile_b), jnp.float32) for _ in range(5)],
        compiler_params=pltpu.CompilerParams(
            # Chunk axis is parallel (disjoint accumulators + outputs per chunk);
            # inner batch-tile axis is the cross-step accumulation axis.
            dimension_semantics=("parallel", "arbitrary"),
            vmem_limit_bytes=32 * 1024 * 1024),
        cost_estimate=cost,
    )(feat, centers, c2_col, ones_row, labels2d, params)

    # ---- tiny finalize in plain JAX (combines per-chunk partial sums) ----
    s = jnp.sum(stats, axis=0)                                  # (K, 128)
    ce_s, open_s, kk_s, uk_s, n_pos = s[:, 0], s[:, 1], s[:, 2], s[:, 3], s[:, 4]
    b_true = jnp.float32(B)
    n_neg = b_true - n_pos
    present = (n_pos > 0.0).astype(jnp.float32)                 # classes seen in batch
    # Safe denominators: a present class with zero negatives would be NaN (mean over
    # an empty slice) in PyTorch; here it yields a finite value instead.
    inv_pos = 1.0 / jnp.maximum(n_pos, 1.0)
    inv_neg = 1.0 / jnp.maximum(n_neg, 1.0)

    cla = jnp.sum(present * ce_s) / b_true
    ge = jnp.sum(present * ((1.0 - alpha) * open_s * inv_neg
                            + alpha * (kk_s * inv_pos + uk_s * inv_neg)))
    loss = (1.0 - beta) * cla + beta * ge

    logits = logits_t[:, :B].T                                  # (B, C)
    return logits, loss, {"cla": cla, "ge": ge}


def ordl_reference_numpy(feat, centers, radius1, radius2, labels, *, alpha, beta):
    """Pure numpy re-implementation of the PyTorch forward for verification."""
    feat = np.asarray(feat, np.float64)
    centers = np.asarray(centers, np.float64)
    labels = np.asarray(labels)
    D = feat.shape[1]
    dot = feat @ centers.T
    f2 = np.sum(feat ** 2, axis=1, keepdims=True)
    c2 = np.sum(centers ** 2, axis=1, keepdims=True)
    l2 = (f2 - 2.0 * dot + c2.T) / D
    logits = dot - l2

    cla = 0.0
    ge = 0.0
    for i in np.unique(labels):                      # pd.get_dummies columns
        i = int(i)
        oh = labels == i
        b_dot = np.stack([logits[:, -1], logits[:, i]], axis=1)   # (B, 2)
        m = b_dot.max(axis=1)
        lse = m + np.log(np.exp(b_dot[:, 0] - m) + np.exp(b_dot[:, 1] - m))
        picked = np.where(oh, b_dot[:, 1], b_dot[:, 0])
        cla += np.mean(lse - picked)

        kk = l2[:, i][oh]
        uk = l2[:, i][~oh]
        uu = l2[:, -1][~oh]
        open_risk = np.mean(np.maximum(0.0, 1.0 + uu - radius1))
        k_margin = (np.mean(np.maximum(0.0, 1.0 + kk - radius2)) +
                    np.mean(np.maximum(0.0, 1.0 + radius2 - uk)))
        ge += (1.0 - alpha) * open_risk + alpha * k_margin

    loss = (1.0 - beta) * cla + beta * ge
    return logits, loss, {"cla": cla, "ge": ge}


if __name__ == "__main__":
    key = jax.random.PRNGKey(0)
    K = 4                        # known classes
    C = K + 1                    # + "unknown" reciprocal point
    D = 32                       # feat_dim

    # ---- test 1: tiny batch (single chunk / single tile, padded inside wrapper) ----
    B = 8
    k1, k2, k3 = jax.random.split(key, 3)
    feat = jax.random.normal(k1, (B, D), dtype=jnp.float32)
    centers = 0.1 * jax.random.normal(k2, (C, D), dtype=jnp.float32)
    labels = jnp.array([0, 1, 2, 3, 0, 1, 2, 3], dtype=jnp.int32)
    radius1, radius2 = 1.0, 0.5
    alpha, beta = 0.5, 0.5

    logits, loss, aux = ordl_loss(feat, centers, radius1, radius2, labels,
                                  alpha=alpha, beta=beta)
    jax.block_until_ready((logits, loss))

    ref_logits, ref_loss, ref_aux = ordl_reference_numpy(
        feat, centers, radius1, radius2, labels, alpha=alpha, beta=beta)
    np.testing.assert_allclose(np.asarray(logits), ref_logits, rtol=1e-3, atol=1e-3)
    np.testing.assert_allclose(float(loss), ref_loss, rtol=1e-3, atol=1e-3)
    np.testing.assert_allclose(float(aux["cla"]), ref_aux["cla"], rtol=1e-3, atol=1e-3)
    np.testing.assert_allclose(float(aux["ge"]), ref_aux["ge"], rtol=1e-3, atol=1e-3)

    # ---- test 2: two parallel chunks, ragged (padded) last tile, one absent class ----
    B2 = 200
    k4, k5, k6 = jax.random.split(k3, 3)
    feat2 = jax.random.normal(k4, (B2, D), dtype=jnp.float32)
    centers2 = 0.1 * jax.random.normal(k5, (C, D), dtype=jnp.float32)
    labels2 = jax.random.randint(k6, (B2,), 0, K - 1, dtype=jnp.int32)   # class K-1 absent
    logits2, loss2, aux2 = ordl_loss(feat2, centers2, 1.2, 0.4, labels2,
                                     alpha=0.3, beta=0.7, tile_b=128)
    jax.block_until_ready((logits2, loss2))

    ref_logits2, ref_loss2, ref_aux2 = ordl_reference_numpy(
        feat2, centers2, 1.2, 0.4, labels2, alpha=0.3, beta=0.7)
    np.testing.assert_allclose(np.asarray(logits2), ref_logits2, rtol=1e-3, atol=1e-3)
    np.testing.assert_allclose(float(loss2), ref_loss2, rtol=1e-3, atol=1e-3)
    np.testing.assert_allclose(float(aux2["cla"]), ref_aux2["cla"], rtol=1e-3, atol=1e-3)
    np.testing.assert_allclose(float(aux2["ge"]), ref_aux2["ge"], rtol=1e-3, atol=1e-3)

    # ---- test 3: bf16 feat streamed narrow (halved HBM bytes), auto tile, 2 chunks ----
    B3 = 640
    k7, k8, k9 = jax.random.split(k6, 3)
    feat3 = jax.random.normal(k7, (B3, D), dtype=jnp.float32).astype(jnp.bfloat16)
    centers3 = 0.1 * jax.random.normal(k8, (C, D), dtype=jnp.float32)
    labels3 = jax.random.randint(k9, (B3,), 0, K, dtype=jnp.int32)
    logits3, loss3, aux3 = ordl_loss(feat3, centers3, 0.9, 0.6, labels3,
                                     alpha=0.4, beta=0.6)
    jax.block_until_ready((logits3, loss3))

    # Reference sees the same bf16-rounded features; kernel math is f32 internally,
    # only the stored logits are bf16.
    feat3_f32 = np.asarray(feat3.astype(jnp.float32))
    ref_logits3, ref_loss3, ref_aux3 = ordl_reference_numpy(
        feat3_f32, centers3, 0.9, 0.6, labels3, alpha=0.4, beta=0.6)
    np.testing.assert_allclose(np.asarray(logits3, dtype=np.float32), ref_logits3,
                               rtol=5e-2, atol=5e-2)
    np.testing.assert_allclose(float(loss3), ref_loss3, rtol=2e-3, atol=2e-3)
    np.testing.assert_allclose(float(aux3["cla"]), ref_aux3["cla"], rtol=2e-3, atol=2e-3)
    np.testing.assert_allclose(float(aux3["ge"]), ref_aux3["ge"], rtol=2e-3, atol=2e-3)

    print("KERNEL_OK")
</pallas_src>

<mosaic_0001>
module attributes {stable_mosaic.version = 11 : i64} {
  func.func @_ordl_kernel(%arg0: i32, %arg1: i32, %arg2: memref<128x32xf32, #tpu.memory_space<vmem>>, %arg3: memref<5x32xf32, #tpu.memory_space<vmem>>, %arg4: memref<5x1xf32, #tpu.memory_space<vmem>>, %arg5: memref<1x32xf32, #tpu.memory_space<vmem>>, %arg6: memref<1x128xi32, #tpu.memory_space<vmem>>, %arg7: memref<2xf32, #tpu.memory_space<smem>>, %arg8: memref<5x128xf32, #tpu.memory_space<vmem>>, %arg9: memref<1x4x128xf32, #tpu.memory_space<vmem>>, %arg10: memref<4x128xf32, #tpu.memory_space<vmem>>, %arg11: memref<4x128xf32, #tpu.memory_space<vmem>>, %arg12: memref<4x128xf32, #tpu.memory_space<vmem>>, %arg13: memref<4x128xf32, #tpu.memory_space<vmem>>, %arg14: memref<4x128xf32, #tpu.memory_space<vmem>>) attributes {dimension_semantics = [#tpu.dimension_semantics<parallel>, #tpu.dimension_semantics<arbitrary>], iteration_bounds = array<i64: 1, 1>, scalar_prefetch = 0 : i64, scratch_operands = 5 : i64, tpu.core_type = #tpu.core_type<tc>, window_params = [{transform_indices = @transform_0, window_bounds = array<i64: 128, 32>}, {pipeline_mode = #tpu.pipeline_mode<synchronous>, transform_indices = @transform_1, window_bounds = array<i64: 5, 32>}, {pipeline_mode = #tpu.pipeline_mode<synchronous>, transform_indices = @transform_2, window_bounds = array<i64: 5, 1>}, {pipeline_mode = #tpu.pipeline_mode<synchronous>, transform_indices = @transform_3, window_bounds = array<i64: 1, 32>}, {transform_indices = @transform_4, window_bounds = array<i64: 1, 128>}, {transform_indices = @transform_5, window_bounds = array<i64: 2>}, {transform_indices = @transform_6, window_bounds = array<i64: 5, 128>}, {transform_indices = @transform_7, window_bounds = array<i64: 1, 4, 128>}]} {
    %c0 = arith.constant 0 : index
    %0 = memref.load %arg7[%c0] : memref<2xf32, #tpu.memory_space<smem>>
    %c1 = arith.constant 1 : index
    %1 = memref.load %arg7[%c1] : memref<2xf32, #tpu.memory_space<smem>>
    %c0_i32 = arith.constant 0 : i32
    %2 = arith.cmpi eq, %arg1, %c0_i32 : i32
    %3 = arith.extui %2 : i1 to i32
    %c0_i32_0 = arith.constant 0 : i32
    %4 = arith.cmpi ne, %3, %c0_i32_0 : i32
    scf.if %4 {
      %cst_50 = arith.constant 0.000000e+00 : f32
      %96 = vector.broadcast %cst_50 : f32 to vector<4x128xf32>
      %c0_51 = arith.constant 0 : index
      %c0_52 = arith.constant 0 : index
      %97 = vector.load %arg10[%c0_51, %c0_52] : memref<4x128xf32, #tpu.memory_space<vmem>>, vector<4x128xf32>
      tpu.vector_store %arg10[%c0_51, %c0_52], %96 {strides = array<i32>} : memref<4x128xf32, #tpu.memory_space<vmem>>, vector<4x128xf32>,
      %cst_53 = arith.constant 0.000000e+00 : f32
      %98 = vector.broadcast %cst_53 : f32 to vector<4x128xf32>
      %c0_54 = arith.constant 0 : index
      %c0_55 = arith.constant 0 : index
      %99 = vector.load %arg11[%c0_54, %c0_55] : memref<4x128xf32, #tpu.memory_space<vmem>>, vector<4x128xf32>
      tpu.vector_store %arg11[%c0_54, %c0_55], %98 {strides = array<i32>} : memref<4x128xf32, #tpu.memory_space<vmem>>, vector<4x128xf32>,
      %cst_56 = arith.constant 0.000000e+00 : f32
      %100 = vector.broadcast %cst_56 : f32 to vector<4x128xf32>
      %c0_57 = arith.constant 0 : index
      %c0_58 = arith.constant 0 : index
      %101 = vector.load %arg12[%c0_57, %c0_58] : memref<4x128xf32, #tpu.memory_space<vmem>>, vector<4x128xf32>
      tpu.vector_store %arg12[%c0_57, %c0_58], %100 {strides = array<i32>} : memref<4x128xf32, #tpu.memory_space<vmem>>, vector<4x128xf32>,
      %cst_59 = arith.constant 0.000000e+00 : f32
      %102 = vector.broadcast %cst_59 : f32 to vector<4x128xf32>
      %c0_60 = arith.constant 0 : index
      %c0_61 = arith.constant 0 : index
      %103 = vector.load %arg13[%c0_60, %c0_61] : memref<4x128xf32, #tpu.memory_space<vmem>>, vector<4x128xf32>
      tpu.vector_store %arg13[%c0_60, %c0_61], %102 {strides = array<i32>} : memref<4x128xf32, #tpu.memory_space<vmem>>, vector<4x128xf32>,
      %cst_62 = arith.constant 0.000000e+00 : f32
      %104 = vector.broadcast %cst_62 : f32 to vector<4x128xf32>
      %c0_63 = arith.constant 0 : index
      %c0_64 = arith.constant 0 : index
      %105 = vector.load %arg14[%c0_63, %c0_64] : memref<4x128xf32, #tpu.memory_space<vmem>>, vector<4x128xf32>
      tpu.vector_store %arg14[%c0_63, %c0_64], %104 {strides = array<i32>} : memref<4x128xf32, #tpu.memory_space<vmem>>, vector<4x128xf32>,
    } else {
    }
    %c0_1 = arith.constant 0 : index
    %c0_2 = arith.constant 0 : index
    %5 = vector.load %arg2[%c0_1, %c0_2] : memref<128x32xf32, #tpu.memory_space<vmem>>, vector<128x32xf32>
    %6 = arith.mulf %5, %5 : vector<128x32xf32>
    %c0_3 = arith.constant 0 : index
    %c0_4 = arith.constant 0 : index
    %7 = vector.load %arg3[%c0_3, %c0_4] : memref<5x32xf32, #tpu.memory_space<vmem>>, vector<5x32xf32>
    %cst = arith.constant dense<0.000000e+00> : vector<5x128xf32>
    %8 = tpu.matmul %7, %5, %cst {dimension_numbers = #tpu.dot_dimension_numbers<[1], [1], [0], [0], [0, 0, 1, 0], [], []>} : vector<5x32xf32>, vector<128x32xf32>, vector<5x128xf32> -> vector<5x128xf32>
    %c0_5 = arith.constant 0 : index
    %c0_6 = arith.constant 0 : index
    %9 = vector.load %arg5[%c0_5, %c0_6] : memref<1x32xf32, #tpu.memory_space<vmem>>, vector<1x32xf32>
    %cst_7 = arith.constant dense<0.000000e+00> : vector<1x128xf32>
    %10 = tpu.matmul %9, %6, %cst_7 {dimension_numbers = #tpu.dot_dimension_numbers<[1], [1], [0], [0], [0, 0, 1, 0], [], []>} : vector<1x32xf32>, vector<128x32xf32>, vector<1x128xf32> -> vector<1x128xf32>
    %c0_8 = arith.constant 0 : index
    %c0_9 = arith.constant 0 : index
    %11 = vector.load %arg4[%c0_8, %c0_9] : memref<5x1xf32, #tpu.memory_space<vmem>>, vector<5x1xf32>
    %cst_10 = arith.constant 1.062500e+00 : f32
    %12 = vector.broadcast %cst_10 : f32 to vector<5x128xf32>
    %13 = arith.mulf %8, %12 : vector<5x128xf32>
    %14 = vector.broadcast %10 : vector<1x128xf32> to vector<5x128xf32>
    %15 = vector.broadcast %11 : vector<5x1xf32> to vector<5x128xf32>
    %16 = arith.addf %14, %15 : vector<5x128xf32>
    %cst_11 = arith.constant 3.125000e-02 : f32
    %17 = vector.broadcast %cst_11 : f32 to vector<5x128xf32>
    %18 = arith.mulf %16, %17 : vector<5x128xf32>
    %19 = arith.subf %13, %18 : vector<5x128xf32>
    %c0_12 = arith.constant 0 : index
    %c0_13 = arith.constant 0 : index
    %20 = vector.load %arg8[%c0_12, %c0_13] : memref<5x128xf32, #tpu.memory_space<vmem>>, vector<5x128xf32>
    tpu.vector_store %arg8[%c0_12, %c0_13], %19 {strides = array<i32>} : memref<5x128xf32, #tpu.memory_space<vmem>>, vector<5x128xf32>,
    %21 = arith.subf %8, %19 : vector<5x128xf32>
    %22 = vector.extract_strided_slice %21 {offsets = [0, 0], sizes = [4, 128], strides = [1, 1]} : vector<5x128xf32> to vector<4x128xf32>
    %23 = vector.extract_strided_slice %21 {offsets = [4, 0], sizes = [1, 128], strides = [1, 1]} : vector<5x128xf32> to vector<1x128xf32>
    %24 = vector.extract_strided_slice %19 {offsets = [0, 0], sizes = [4, 128], strides = [1, 1]} : vector<5x128xf32> to vector<4x128xf32>
    %25 = vector.extract_strided_slice %19 {offsets = [4, 0], sizes = [1, 128], strides = [1, 1]} : vector<5x128xf32> to vector<1x128xf32>
    %26 = vector.broadcast %25 : vector<1x128xf32> to vector<4x128xf32>
    %27 = arith.subf %24, %26 : vector<4x128xf32>
    %c0_14 = arith.constant 0 : index
    %c0_15 = arith.constant 0 : index
    %28 = vector.load %arg6[%c0_14, %c0_15] : memref<1x128xi32, #tpu.memory_space<vmem>>, vector<1x128xi32>
    %29 = tpu.iota {dimensions = array<i32: 0>} : vector<4x128xi32>
    %30 = vector.broadcast %28 : vector<1x128xi32> to vector<4x128xi32>
    %31 = arith.cmpi eq, %30, %29 : vector<4x128xi32>
    %32 = arith.extui %31 : vector<4x128xi1> to vector<4x128xi32>
    %33 = arith.sitofp %32 : vector<4x128xi32> to vector<4x128xf32>
    %c0_i32_16 = arith.constant 0 : i32
    %34 = vector.broadcast %c0_i32_16 : i32 to vector<1x128xi32>
    %35 = arith.cmpi sge, %28, %34 : vector<1x128xi32>
    %36 = arith.extui %35 : vector<1x128xi1> to vector<1x128xi32>
    %37 = arith.sitofp %36 : vector<1x128xi32> to vector<1x128xf32>
    %38 = vector.broadcast %37 : vector<1x128xf32> to vector<4x128xf32>
    %39 = arith.subf %38, %33 : vector<4x128xf32>
    %cst_17 = arith.constant 2.000000e+00 : f32
    %40 = vector.broadcast %cst_17 : f32 to vector<4x128xf32>
    %41 = arith.mulf %40, %33 : vector<4x128xf32>
    %cst_18 = arith.constant 1.000000e+00 : f32
    %42 = vector.broadcast %cst_18 : f32 to vector<4x128xf32>
    %43 = arith.subf %42, %41 : vector<4x128xf32>
    %44 = arith.mulf %43, %27 : vector<4x128xf32>
    %cst_19 = arith.constant 0.000000e+00 : f32
    %45 = vector.broadcast %cst_19 : f32 to vector<4x128xf32>
    %46 = arith.maximumf %44, %45 : vector<4x128xf32>
    %47 = math.absf %44 : vector<4x128xf32>
    %cst_20 = arith.constant 0.000000e+00 : f32
    %48 = vector.broadcast %cst_20 : f32 to vector<4x128xf32>
    %49 = arith.subf %48, %47 : vector<4x128xf32>
    %50 = math.exp %49 : vector<4x128xf32>
    %cst_21 = arith.constant 1.000000e+00 : f32
    %51 = vector.broadcast %cst_21 : f32 to vector<4x128xf32>
    %52 = arith.addf %51, %50 : vector<4x128xf32>
    %53 = math.log %52 : vector<4x128xf32>
    %54 = arith.addf %46, %53 : vector<4x128xf32>
    %c0_22 = arith.constant 0 : index
    %c0_23 = arith.constant 0 : index
    %55 = vector.load %arg10[%c0_22, %c0_23] : memref<4x128xf32, #tpu.memory_space<vmem>>, vector<4x128xf32>
    %56 = vector.broadcast %37 : vector<1x128xf32> to vector<4x128xf32>
    %57 = arith.mulf %54, %56 : vector<4x128xf32>
    %58 = arith.addf %55, %57 : vector<4x128xf32>
    %c0_24 = arith.constant 0 : index
    %c0_25 = arith.constant 0 : index
    %59 = vector.load %arg10[%c0_24, %c0_25] : memref<4x128xf32, #tpu.memory_space<vmem>>, vector<4x128xf32>
    tpu.vector_store %arg10[%c0_24, %c0_25], %58 {strides = array<i32>} : memref<4x128xf32, #tpu.memory_space<vmem>>, vector<4x128xf32>,
    %c0_26 = arith.constant 0 : index
    %c0_27 = arith.constant 0 : index
    %60 = vector.load %arg11[%c0_26, %c0_27] : memref<4x128xf32, #tpu.memory_space<vmem>>, vector<4x128xf32>
    %cst_28 = arith.constant 1.000000e+00 : f32
    %61 = vector.broadcast %cst_28 : f32 to vector<1x128xf32>
    %62 = arith.addf %61, %23 : vector<1x128xf32>
    %63 = vector.broadcast %0 : f32 to vector<1x128xf32>
    %64 = arith.subf %62, %63 : vector<1x128xf32>
    %cst_29 = arith.constant 0.000000e+00 : f32
    %65 = vector.broadcast %cst_29 : f32 to vector<1x128xf32>
    %66 = arith.maximumf %65, %64 : vector<1x128xf32>
    %67 = vector.broadcast %66 : vector<1x128xf32> to vector<4x128xf32>
    %68 = arith.mulf %67, %39 : vector<4x128xf32>
    %69 = arith.addf %60, %68 : vector<4x128xf32>
    %c0_30 = arith.constant 0 : index
    %c0_31 = arith.constant 0 : index
    %70 = vector.load %arg11[%c0_30, %c0_31] : memref<4x128xf32, #tpu.memory_space<vmem>>, vector<4x128xf32>
    tpu.vector_store %arg11[%c0_30, %c0_31], %69 {strides = array<i32>} : memref<4x128xf32, #tpu.memory_space<vmem>>, vector<4x128xf32>,
    %c0_32 = arith.constant 0 : index
    %c0_33 = arith.constant 0 : index
    %71 = vector.load %arg12[%c0_32, %c0_33] : memref<4x128xf32, #tpu.memory_space<vmem>>, vector<4x128xf32>
    %cst_34 = arith.constant 1.000000e+00 : f32
    %72 = vector.broadcast %cst_34 : f32 to vector<4x128xf32>
    %73 = arith.addf %72, %22 : vector<4x128xf32>
    %74 = vector.broadcast %1 : f32 to vector<4x128xf32>
    %75 = arith.subf %73, %74 : vector<4x128xf32>
    %cst_35 = arith.constant 0.000000e+00 : f32
    %76 = vector.broadcast %cst_35 : f32 to vector<4x128xf32>
    %77 = arith.maximumf %76, %75 : vector<4x128xf32>
    %78 = arith.mulf %77, %33 : vector<4x128xf32>
    %79 = arith.addf %71, %78 : vector<4x128xf32>
    %c0_36 = arith.constant 0 : index
    %c0_37 = arith.constant 0 : index
    %80 = vector.load %arg12[%c0_36, %c0_37] : memref<4x128xf32, #tpu.memory_space<vmem>>, vector<4x128xf32>
    tpu.vector_store %arg12[%c0_36, %c0_37], %79 {strides = array<i32>} : memref<4x128xf32, #tpu.memory_space<vmem>>, vector<4x128xf32>,
    %c0_38 = arith.constant 0 : index
    %c0_39 = arith.constant 0 : index
    %81 = vector.load %arg13[%c0_38, %c0_39] : memref<4x128xf32, #tpu.memory_space<vmem>>, vector<4x128xf32>
    %cst_40 = arith.constant 1.000000e+00 : f32
    %82 = arith.addf %cst_40, %1 : f32
    %83 = vector.broadcast %82 : f32 to vector<4x128xf32>
    %84 = arith.subf %83, %22 : vector<4x128xf32>
    %cst_41 = arith.constant 0.000000e+00 : f32
    %85 = vector.broadcast %cst_41 : f32 to vector<4x128xf32>
    %86 = arith.maximumf %85, %84 : vector<4x128xf32>
    %87 = arith.mulf %86, %39 : vector<4x128xf32>
    %88 = arith.addf %81, %87 : vector<4x128xf32>
    %c0_42 = arith.constant 0 : index
    %c0_43 = arith.constant 0 : index
    %89 = vector.load %arg13[%c0_42, %c0_43] : memref<4x128xf32, #tpu.memory_space<vmem>>, vector<4x128xf32>
    tpu.vector_store %arg13[%c0_42, %c0_43], %88 {strides = array<i32>} : memref<4x128xf32, #tpu.memory_space<vmem>>, vector<4x128xf32>,
    %c0_44 = arith.constant 0 : index
    %c0_45 = arith.constant 0 : index
    %90 = vector.load %arg14[%c0_44, %c0_45] : memref<4x128xf32, #tpu.memory_space<vmem>>, vector<4x128xf32>
    %91 = arith.addf %90, %33 : vector<4x128xf32>
    %c0_46 = arith.constant 0 : index
    %c0_47 = arith.constant 0 : index
    %92 = vector.load %arg14[%c0_46, %c0_47] : memref<4x128xf32, #tpu.memory_space<vmem>>, vector<4x128xf32>
    tpu.vector_store %arg14[%c0_46, %c0_47], %91 {strides = array<i32>} : memref<4x128xf32, #tpu.memory_space<vmem>>, vector<4x128xf32>,
    %c0_i32_48 = arith.constant 0 : i32
    %93 = arith.cmpi eq, %arg1, %c0_i32_48 : i32
    %94 = arith.extui %93 : i1 to i32
    %c0_i32_49 = arith.constant 0 : i32
    %95 = arith.cmpi ne, %94, %c0_i32_49 : i32
    scf.if %95 {
      %96 = tpu.iota {dimensions = array<i32: 1>} : vector<4x128xi32>
      %c0_50 = arith.constant 0 : index
      %c0_51 = arith.constant 0 : index
      %97 = vector.load %arg10[%c0_50, %c0_51] : memref<4x128xf32, #tpu.memory_space<vmem>>, vector<4x128xf32>
      %cst_52 = arith.constant dense<0.000000e+00> : vector<4xf32>
      %98 = vector.multi_reduction <add>, %97, %cst_52 [1] : vector<4x128xf32> to vector<4xf32>
      %99 = vector.shape_cast %98 : vector<4xf32> to vector<4x1xf32>
      %c0_53 = arith.constant 0 : index
      %c0_54 = arith.constant 0 : index
      %100 = vector.load %arg11[%c0_53, %c0_54] : memref<4x128xf32, #tpu.memory_space<vmem>>, vector<4x128xf32>
      %cst_55 = arith.constant dense<0.000000e+00> : vector<4xf32>
      %101 = vector.multi_reduction <add>, %100, %cst_55 [1] : vector<4x128xf32> to vector<4xf32>
      %102 = vector.shape_cast %101 : vector<4xf32> to vector<4x1xf32>
      %c0_56 = arith.constant 0 : index
      %c0_57 = arith.constant 0 : index
      %103 = vector.load %arg12[%c0_56, %c0_57] : memref<4x128xf32, #tpu.memory_space<vmem>>, vector<4x128xf32>
      %cst_58 = arith.constant dense<0.000000e+00> : vector<4xf32>
      %104 = vector.multi_reduction <add>, %103, %cst_58 [1] : vector<4x128xf32> to vector<4xf32>
      %105 = vector.shape_cast %104 : vector<4xf32> to vector<4x1xf32>
      %c0_59 = arith.constant 0 : index
      %c0_60 = arith.constant 0 : index
      %106 = vector.load %arg13[%c0_59, %c0_60] : memref<4x128xf32, #tpu.memory_space<vmem>>, vector<4x128xf32>
      %cst_61 = arith.constant dense<0.000000e+00> : vector<4xf32>
      %107 = vector.multi_reduction <add>, %106, %cst_61 [1] : vector<4x128xf32> to vector<4xf32>
      %108 = vector.shape_cast %107 : vector<4xf32> to vector<4x1xf32>
      %c0_62 = arith.constant 0 : index
      %c0_63 = arith.constant 0 : index
      %109 = vector.load %arg14[%c0_62, %c0_63] : memref<4x128xf32, #tpu.memory_space<vmem>>, vector<4x128xf32>
      %cst_64 = arith.constant dense<0.000000e+00> : vector<4xf32>
      %110 = vector.multi_reduction <add>, %109, %cst_64 [1] : vector<4x128xf32> to vector<4xf32>
      %111 = vector.shape_cast %110 : vector<4xf32> to vector<4x1xf32>
      %c0_i32_65 = arith.constant 0 : i32
      %112 = vector.broadcast %c0_i32_65 : i32 to vector<4x128xi32>
      %113 = arith.cmpi eq, %96, %112 : vector<4x128xi32>
      %c1_i32 = arith.constant 1 : i32
      %114 = vector.broadcast %c1_i32 : i32 to vector<4x128xi32>
      %115 = arith.cmpi eq, %96, %114 : vector<4x128xi32>
      %c2_i32 = arith.constant 2 : i32
      %116 = vector.broadcast %c2_i32 : i32 to vector<4x128xi32>
      %117 = arith.cmpi eq, %96, %116 : vector<4x128xi32>
      %c3_i32 = arith.constant 3 : i32
      %118 = vector.broadcast %c3_i32 : i32 to vector<4x128xi32>
      %119 = arith.cmpi eq, %96, %118 : vector<4x128xi32>
      %c4_i32 = arith.constant 4 : i32
      %120 = vector.broadcast %c4_i32 : i32 to vector<4x128xi32>
      %121 = arith.cmpi eq, %96, %120 : vector<4x128xi32>
      %cst_66 = arith.constant 0.000000e+00 : f32
      %122 = vector.shape_cast %111 : vector<4x1xf32> to vector<4x1xf32>
      %123 = vector.broadcast %122 : vector<4x1xf32> to vector<4x128xf32>
      %124 = vector.broadcast %cst_66 : f32 to vector<4x128xf32>
      %125 = arith.select %121, %123, %124 : vector<4x128xi1>, vector<4x128xf32>
      %126 = vector.shape_cast %108 : vector<4x1xf32> to vector<4x1xf32>
      %127 = vector.broadcast %126 : vector<4x1xf32> to vector<4x128xf32>
      %128 = arith.select %119, %127, %125 : vector<4x128xi1>, vector<4x128xf32>
      %129 = vector.shape_cast %105 : vector<4x1xf32> to vector<4x1xf32>
      %130 = vector.broadcast %129 : vector<4x1xf32> to vector<4x128xf32>
      %131 = arith.select %117, %130, %128 : vector<4x128xi1>, vector<4x128xf32>
      %132 = vector.shape_cast %102 : vector<4x1xf32> to vector<4x1xf32>
      %133 = vector.broadcast %132 : vector<4x1xf32> to vector<4x128xf32>
      %134 = arith.select %115, %133, %131 : vector<4x128xi1>, vector<4x128xf32>
      %135 = vector.shape_cast %99 : vector<4x1xf32> to vector<4x1xf32>
      %136 = vector.broadcast %135 : vector<4x1xf32> to vector<4x128xf32>
      %137 = arith.select %113, %136, %134 : vector<4x128xi1>, vector<4x128xf32>
      %c0_67 = arith.constant 0 : index
      %c0_68 = arith.constant 0 : index
      %c0_69 = arith.constant 0 : index
      %138 = vector.load %arg9[%c0_67, %c0_68, %c0_69] : memref<1x4x128xf32, #tpu.memory_space<vmem>>, vector<1x4x128xf32>
      %139 = vector.shape_cast %138 : vector<1x4x128xf32> to vector<4x128xf32>
      %140 = vector.shape_cast %137 : vector<4x128xf32> to vector<1x4x128xf32>
      tpu.vector_store %arg9[%c0_67, %c0_68, %c0_69], %140 {strides = array<i32>} : memref<1x4x128xf32, #tpu.memory_space<vmem>>, vector<1x4x128xf32>,
    } else {
    }
    return
  }
  func.func @transform_0(%arg0: i32, %arg1: i32) -> (i32, i32) {
    %c1_i32 = arith.constant 1 : i32
    %0 = arith.muli %arg0, %c1_i32 : i32
    %1 = arith.addi %0, %arg1 : i32
    %c0_i32 = arith.constant 0 : i32
    %c0_i32_0 = arith.constant 0 : i32
    return %1, %c0_i32 : i32, i32
  }
  func.func @transform_1(%arg0: i32, %arg1: i32) -> (i32, i32) {
    %c0_i32 = arith.constant 0 : i32
    %c0_i32_0 = arith.constant 0 : i32
    %c0_i32_1 = arith.constant 0 : i32
    return %c0_i32, %c0_i32_0 : i32, i32
  }
  func.func @transform_2(%arg0: i32, %arg1: i32) -> (i32, i32) {
    %c0_i32 = arith.constant 0 : i32
    %c0_i32_0 = arith.constant 0 : i32
    %c0_i32_1 = arith.constant 0 : i32
    return %c0_i32, %c0_i32_0 : i32, i32
  }
  func.func @transform_3(%arg0: i32, %arg1: i32) -> (i32, i32) {
    %c0_i32 = arith.constant 0 : i32
    %c0_i32_0 = arith.constant 0 : i32
    %c0_i32_1 = arith.constant 0 : i32
    return %c0_i32, %c0_i32_0 : i32, i32
  }
  func.func @transform_4(%arg0: i32, %arg1: i32) -> (i32, i32) {
    %c1_i32 = arith.constant 1 : i32
    %0 = arith.muli %arg0, %c1_i32 : i32
    %1 = arith.addi %0, %arg1 : i32
    %c0_i32 = arith.constant 0 : i32
    %c0_i32_0 = arith.constant 0 : i32
    return %c0_i32, %1 : i32, i32
  }
  func.func @transform_5(%arg0: i32, %arg1: i32) -> i32 {
    %c0_i32 = arith.constant 0 : i32
    %c0_i32_0 = arith.constant 0 : i32
    return %c0_i32 : i32
  }
  func.func @transform_6(%arg0: i32, %arg1: i32) -> (i32, i32) {
    %c1_i32 = arith.constant 1 : i32
    %0 = arith.muli %arg0, %c1_i32 : i32
    %1 = arith.addi %0, %arg1 : i32
    %c0_i32 = arith.constant 0 : i32
    %c0_i32_0 = arith.constant 0 : i32
    return %c0_i32, %1 : i32, i32
  }
  func.func @transform_7(%arg0: i32, %arg1: i32) -> (i32, i32, i32) {
    %c0_i32 = arith.constant 0 : i32
    %c0_i32_0 = arith.constant 0 : i32
    %c0_i32_1 = arith.constant 0 : i32
    return %arg0, %c0_i32, %c0_i32_0 : i32, i32, i32
  }
}

</mosaic_0001>

<llo_original>
// kernel: tpu_custom_call.1
$region0: #{tpu_custom_call.1}
  #allocation0 [shape = 'u32[]', space=smem, size = 0x4, offset = 0x4, fixed_abs, tag = 'smem constant byte address 0x4 - core index']
  #allocation1 [shape = 'u32[72,128]{1,0:T(1,128)}', space=vmem, size = 0x9000, scoped, tag = 'internal scratch']
  #allocation2 [shape = 'f32[4,128]{1,0:T(4,128)}', space=vmem, size = 0x800, scoped, tag = 'scratch operand']
  #allocation3 [shape = 'f32[4,128]{1,0:T(4,128)}', space=vmem, size = 0x800, scoped, tag = 'scratch operand']
  #allocation4 [shape = 'f32[4,128]{1,0:T(4,128)}', space=vmem, size = 0x800, scoped, tag = 'scratch operand']
  #allocation5 [shape = 'f32[4,128]{1,0:T(4,128)}', space=vmem, size = 0x800, scoped, tag = 'scratch operand']
  #allocation6 [shape = 'f32[4,128]{1,0:T(4,128)}', space=vmem, size = 0x800, scoped, tag = 'scratch operand']
  %s0 = inlined_call_operand.vmem [shape: f32[128,32], index: 0, kind: input, shape index: {}]
  %s1 = inlined_call_operand.vmem [shape: f32[5,32], index: 1, kind: input, shape index: {}]
  %s2 = inlined_call_operand.vmem [shape: f32[5,1], index: 2, kind: input, shape index: {}]
  %s3 = inlined_call_operand.vmem [shape: f32[1,32], index: 3, kind: input, shape index: {}]
  %s4 = inlined_call_operand.vmem [shape: s32[1,128], index: 4, kind: input, shape index: {}]
  %s5 = inlined_call_operand.vmem [shape: f32[2], index: 5, kind: input, shape index: {}]
  %s6 = inlined_call_operand.hbm [shape: f32[5,128], index: 6, kind: output, shape index: {0}]
  %s7 = inlined_call_operand.hbm [shape: f32[1,4,128], index: 7, kind: output, shape index: {1}]
  %8 = xla_tuple %s6, %s7
  %s9 = sld [smem:[#allocation0]]
  $region54: #{tpu_custom_call.1} parent=0
    _
  %s11 = ssub.s32 1, %s9
  %s12 = scalar_select 0, %s11, %s9
  $region1: #{tpu_custom_call.1} parent=0
    #allocation7 [shape = 'u8[512]{0}', space=smem, size = 0x200, scoped, tag = 'input window, operand 5, single buffered']
    #allocation8 [shape = 's32[1]{0}', space=sflag, size = 0x4, scoped, tag = 'scoped memory for tpu_custom_call.1']
    #allocation9 [shape = 's32[1]{0}', space=sflag, size = 0x4, scoped, tag = 'scoped memory for tpu_custom_call.1']
    #allocation10 [shape = 'u8[4096]{0}', space=vmem, size = 0x1000, scoped, tag = 'output window, operand 0, single buffered']
    #allocation11 [shape = 'u8[2048]{0}', space=vmem, size = 0x800, scoped, tag = 'output window, operand 1, single buffered']
    #allocation12 [shape = 's32[1]{0}', space=sflag, size = 0x4, scoped, tag = 'scoped memory for tpu_custom_call.1']
    %13 = vsyncpa [#allocation9], 0
    %14 = vsyncpa [#allocation8], 0
    %15 = vsyncpa [#allocation12], 0
    // Predicated region
    $region2: #{tpu_custom_call.1} parent=1 // pred_check
      _
    $region3: #{tpu_custom_call.1} parent=1 // pred_check_branch
      %17 = sbr.rel (0) target = $region5
    $region4: #{tpu_custom_call.1} parent=1 // pred_region
      %s18 = sadd.s32 0, 0
      %s19 = smul.u32 16, %s18
      %p20 = scmp.lt.s32.totalorder %s19, 15
      %s21 = scalar_select %p20, %s19, 15
      %s22 = smul.addr %s21, 8
      %s23 = scalar_lea.vmem %s0, %s22
      %s24 = sadd.s32 0, 0
      %s25 = smul.u32 16, %s24
    $region5: #{tpu_custom_call.1} parent=1 // pred_fallthru
      _
    // Predicated region
    $region6: #{tpu_custom_call.1} parent=1 // pred_check
      _
    $region7: #{tpu_custom_call.1} parent=1 // pred_check_branch
      %27 = sbr.rel (0) target = $region9
    $region8: #{tpu_custom_call.1} parent=1 // pred_region
      _
    $region9: #{tpu_custom_call.1} parent=1 // pred_fallthru
      _
    // Predicated region
    $region10: #{tpu_custom_call.1} parent=1 // pred_check
      _
    $region11: #{tpu_custom_call.1} parent=1 // pred_check_branch
      %29 = sbr.rel (0) target = $region13
    $region12: #{tpu_custom_call.1} parent=1 // pred_region
      _
    $region13: #{tpu_custom_call.1} parent=1 // pred_fallthru
      _
    // Predicated region
    $region14: #{tpu_custom_call.1} parent=1 // pred_check
      _
    $region15: #{tpu_custom_call.1} parent=1 // pred_check_branch
      %31 = sbr.rel (0) target = $region17
    $region16: #{tpu_custom_call.1} parent=1 // pred_region
      _
    $region17: #{tpu_custom_call.1} parent=1 // pred_fallthru
      _
    // Predicated region
    $region18: #{tpu_custom_call.1} parent=1 // pred_check
      _
    $region19: #{tpu_custom_call.1} parent=1 // pred_check_branch
      %33 = sbr.rel (0) target = $region21
    $region20: #{tpu_custom_call.1} parent=1 // pred_region
      %s34 = sadd.s32 0, 0
      %p35 = scmp.lt.s32.totalorder %s34, 0
      %s36 = scalar_select %p35, %s34, 0
      %s37 = scalar_lea.vmem %s4, %s36
      %s38 = sadd.s32 0, 0
    $region21: #{tpu_custom_call.1} parent=1 // pred_fallthru
      _
    // Predicated region
    $region22: #{tpu_custom_call.1} parent=1 // pred_check
      _
    $region23: #{tpu_custom_call.1} parent=1 // pred_check_branch
      %40 = sbr.rel (0) target = $region25
    $region24: #{tpu_custom_call.1} parent=1 // pred_region
      %42 = vsyncadd [#allocation9], 0
      %s44 = sshll.u32 %s5, 4
      %s45 = int_to_ptr.vmem [resolvable:$true] %s44
      %47 = dma.vmem_to_smem %s45, 16, [#allocation7], [#allocation9]
    $region25: #{tpu_custom_call.1} parent=1 // pred_fallthru
      _
    // Predicated region
    $region26: #{tpu_custom_call.1} parent=1 // pred_check
      _
    $region27: #{tpu_custom_call.1} parent=1 // pred_check_branch
      %49 = sbr.rel (0) target = $region29
    $region28: #{tpu_custom_call.1} parent=1 // pred_region
      %51 = dma.done [#allocation9], 16
    $region29: #{tpu_custom_call.1} parent=1 // pred_fallthru
      _
    %52 = sfence
    %s53 = sadd.s32 0, 0
    %s54 = smul.u32 16, %s53
    %p55 = scmp.lt.s32.totalorder %s54, 15
    %s56 = scalar_select %p55, %s54, 15
    %s57 = smul.addr %s56, 8
    %s58 = scalar_lea.vmem %s0, %s57
    %s59 = sadd.s32 0, 0
    %p60 = scmp.lt.s32.totalorder %s59, 0
    %s61 = scalar_select %p60, %s59, 0
    %s62 = scalar_lea.vmem %s4, %s61
    %s63 = sadd.s32 0, 0
    %s64 = smul.u32 16, %s63
    %p65 = scmp.lt.s32.totalorder %s64, 15
    %s66 = scalar_select %p65, %s64, 15
    %s67 = smul.addr %s66, 8
    %s68 = scalar_lea.vmem %s0, %s67
    %s69 = sadd.s32 0, 0
    %s70 = smul.u32 16, %s69
    %s71 = sadd.s32 0, 0
    %p72 = scmp.lt.s32.totalorder %s71, 0
    %s73 = scalar_select %p72, %s71, 0
    %s74 = scalar_lea.vmem %s4, %s73
    %s75 = sadd.s32 0, 0
    %s76 = sadd.s32 0, 0
    %s77 = sld [smem:[#allocation7]]
    %s78 = sld [smem:[#allocation7 + $0x1]]
    %p79 = scmp.eq.s32.totalorder 0, 0
    // Predicated region
    $region30: #{tpu_custom_call.1} parent=1 // pred_check
      %p80 = pneg %p79
    $region31: #{tpu_custom_call.1} parent=1 // pred_check_branch
      %82 = sbr.rel (%p80) target = $region33
    $region32: #{tpu_custom_call.1} parent=1 // pred_region
      %83 = vst [vmem:[#allocation2] sm:$0xf] 0.0
      %84 = vst [vmem:[#allocation3] sm:$0xf] 0.0
      %85 = vst [vmem:[#allocation4] sm:$0xf] 0.0
      %86 = vst [vmem:[#allocation5] sm:$0xf] 0.0
      %87 = vst [vmem:[#allocation6] sm:$0xf] 0.0
    $region33: #{tpu_custom_call.1} parent=1 // pred_fallthru
      _
    %v88 = vld [vmem:[%s68] sm:$0xff]
    %v89 = vld [vmem:[%s68 + $0x8] sm:$0xff]
    %v90 = vld [vmem:[%s68 + $0x10] sm:$0xff]
    %v91 = vld [vmem:[%s68 + $0x18] sm:$0xff]
    %v92 = vld [vmem:[%s68 + $0x20] sm:$0xff]
    %v93 = vld [vmem:[%s68 + $0x28] sm:$0xff]
    %v94 = vld [vmem:[%s68 + $0x30] sm:$0xff]
    %v95 = vld [vmem:[%s68 + $0x38] sm:$0xff]
    %v96 = vld [vmem:[%s68 + $0x40] sm:$0xff]
    %v97 = vld [vmem:[%s68 + $0x48] sm:$0xff]
    %v98 = vld [vmem:[%s68 + $0x50] sm:$0xff]
    %v99 = vld [vmem:[%s68 + $0x58] sm:$0xff]
    %v100 = vld [vmem:[%s68 + $0x60] sm:$0xff]
    %v101 = vld [vmem:[%s68 + $0x68] sm:$0xff]
    %v102 = vld [vmem:[%s68 + $0x70] sm:$0xff]
    %v103 = vld [vmem:[%s68 + $0x78] sm:$0xff]
    %v104 = vmul.f32 %v88, %v88
    %v105 = vmul.f32 %v89, %v89
    %v106 = vmul.f32 %v90, %v90
    %v107 = vmul.f32 %v91, %v91
    %v108 = vmul.f32 %v92, %v92
    %v109 = vmul.f32 %v93, %v93
    %v110 = vmul.f32 %v94, %v94
    %v111 = vmul.f32 %v95, %v95
    %v112 = vmul.f32 %v96, %v96
    %v113 = vmul.f32 %v97, %v97
    %v114 = vmul.f32 %v98, %v98
    %v115 = vmul.f32 %v99, %v99
    %v116 = vmul.f32 %v100, %v100
    %v117 = vmul.f32 %v101, %v101
    %v118 = vmul.f32 %v102, %v102
    %v119 = vmul.f32 %v103, %v103
    %v120 = vld [vmem:[%s1] sm:$0x1f]
    %vm121 = vcmask 261120
    %v123 = vsel %vm121, %v120, 0
    %v126 = vsel %vm121, %v88, 0
    %v129 = vsel %vm121, %v89, 0
    %v132 = vsel %vm121, %v90, 0
    %v135 = vsel %vm121, %v91, 0
    %v138 = vsel %vm121, %v92, 0
    %v141 = vsel %vm121, %v93, 0
    %v144 = vsel %vm121, %v94, 0
    %v147 = vsel %vm121, %v95, 0
    %v150 = vsel %vm121, %v96, 0
    %v153 = vsel %vm121, %v97, 0
    %v156 = vsel %vm121, %v98, 0
    %v159 = vsel %vm121, %v99, 0
    %v162 = vsel %vm121, %v100, 0
    %v165 = vsel %vm121, %v101, 0
    %v168 = vsel %vm121, %v102, 0
    %v171 = vsel %vm121, %v103, 0
    %173 = vmatpush.xpose.msra.mxu0 %v171
    %174 = vmatpush.xpose.msra.mxu0 %v168
    %175 = vmatpush.xpose.msra.mxu0 %v165
    %176 = vmatpush.xpose.msra.mxu0 %v162
    %177 = vmatpush.xpose.msra.mxu0 %v159
    %178 = vmatpush.xpose.msra.mxu0 %v156
    %179 = vmatpush.xpose.msra.mxu0 %v153
    %180 = vmatpush.xpose.msra.mxu0 %v150
    %181 = vmatpush.xpose.msra.mxu0 %v147
    %182 = vmatpush.xpose.msra.mxu0 %v144
    %183 = vmatpush.xpose.msra.mxu0 %v141
    %184 = vmatpush.xpose.msra.mxu0 %v138
    %185 = vmatpush.xpose.msra.mxu0 %v135
    %186 = vmatpush.xpose.msra.mxu0 %v132
    %187 = vmatpush.xpose.msra.mxu0 %v129
    %188 = vmatpush.xpose.msra.mxu0 %v126
    %189 = vmatmul.f32.gmra.mxu0 %v123
    %v190 = vpop.f32.mrf.mxu0
    %v191 = vadd.f32 0.0, %v190
    %192 = vdwg.mxu0
    %v193 = vld [vmem:[%s3] sm:$0x1]
    %v195 = vsel %vm121, %v193, 0
    %v198 = vsel %vm121, %v104, 0
    %v201 = vsel %vm121, %v105, 0
    %v204 = vsel %vm121, %v106, 0
    %v207 = vsel %vm121, %v107, 0
    %v210 = vsel %vm121, %v108, 0
    %v213 = vsel %vm121, %v109, 0
    %v216 = vsel %vm121, %v110, 0
    %v219 = vsel %vm121, %v111, 0
    %v222 = vsel %vm121, %v112, 0
    %v225 = vsel %vm121, %v113, 0
    %v228 = vsel %vm121, %v114, 0
    %v231 = vsel %vm121, %v115, 0
    %v234 = vsel %vm121, %v116, 0
    %v237 = vsel %vm121, %v117, 0
    %v240 = vsel %vm121, %v118, 0
    %v243 = vsel %vm121, %v119, 0
    %245 = vmatpush.xpose.msra.mxu0 %v243
    %246 = vmatpush.xpose.msra.mxu0 %v240
    %247 = vmatpush.xpose.msra.mxu0 %v237
    %248 = vmatpush.xpose.msra.mxu0 %v234
    %249 = vmatpush.xpose.msra.mxu0 %v231
    %250 = vmatpush.xpose.msra.mxu0 %v228
    %251 = vmatpush.xpose.msra.mxu0 %v225
    %252 = vmatpush.xpose.msra.mxu0 %v222
    %253 = vmatpush.xpose.msra.mxu0 %v219
    %254 = vmatpush.xpose.msra.mxu0 %v216
    %255 = vmatpush.xpose.msra.mxu0 %v213
    %256 = vmatpush.xpose.msra.mxu0 %v210
    %257 = vmatpush.xpose.msra.mxu0 %v207
    %258 = vmatpush.xpose.msra.mxu0 %v204
    %259 = vmatpush.xpose.msra.mxu0 %v201
    %260 = vmatpush.xpose.msra.mxu0 %v198
    %261 = vmatmul.f32.gmra.mxu0 %v195
    %v262 = vpop.f32.mrf.mxu0
    %v263 = vadd.f32 0.0, %v262
    %264 = vdwg.mxu0
    %v265 = vld [vmem:[%s2] sm:$0x1f]
    %v266 = vmul.f32 %v191, 1.0625
    %v267 = vperm.slane %v263, 0
    %269 = vset.pattern.permute.xlu0 0
    %270 = vperm.xlu0 %269, %v265
    %v271 = vpop.permute.xlu0 %270
    %v273 = vadd.f32 %v267, %v271
    %v274 = vmul.f32 %v273, 0.03125
    %v275 = vsub.f32 %v266, %v274
    %276 = vst [vmem:[#allocation10] sm:$0x1f] %v275
    %v277 = vsub.f32 %v191, %v275
    %v278 = vperm.slane %v275, 4
    %v279 = vsub.f32 %v275, %v278
    %v280 = vld [vmem:[%s74] sm:$0x1]
    %v281 = vlaneseq
    %v282 = vshrl.u32 %v281, 7
    %v283 = vperm.slane %v280, 0
    %vm284 = vcmp.eq.s32.totalorder %v283, %v282
    %v285 = vsel %vm284, 1, 0
    %v286 = vcvt.s32.f32 %v285
    %vm287 = vcmp.ge.s32.totalorder %v280, 0
    %v288 = vsel %vm287, 1, 0
    %v289 = vcvt.s32.f32 %v288
    %v291 = vperm.slane %v289, 0
    %v293 = vsub.f32 %v291, %v286
    %v294 = vmul.f32 %v286, 2.0
    %v295 = vsub.f32 1.0, %v294
    %v296 = vmul.f32 %v295, %v279
    %v297 = vmax.f32 %v296, 0.0
    %v298 = vand.u32 2147483647, %v296
    %v299 = vsub.f32 0.0, %v298
    %v300 = vmul.f32 %v299, 1.442695
    %v301 = vpow.pop %v300
    %v302 = vadd.f32 %v301, 1.0
    %v303 = vlog2.pop %v302
    %v304 = vmul.f32 %v303, 0.6931472
    %v305 = vadd.f32 %v297, %v304
    %v306 = vld [vmem:[#allocation2] sm:$0xf]
    %v307 = vmul.f32 %v305, %v291
    %v308 = vadd.f32 %v306, %v307
    %309 = vst [vmem:[#allocation2] sm:$0xf] %v308
    %v310 = vld [vmem:[#allocation3] sm:$0xf]
    %v311 = vadd.f32 %v277, 1.0
    %v312 = vstv %s77
    %v313 = vsub.f32 %v311, %v312
    %v314 = vmax.f32 %v313, 0.0
    %v315 = vperm.slane %v314, 4
    %v316 = vmul.f32 %v315, %v293
    %v317 = vadd.f32 %v310, %v316
    %318 = vst [vmem:[#allocation3] sm:$0xf] %v317
    %v319 = vld [vmem:[#allocation4] sm:$0xf]
    %v320 = vstv %s78
    %v321 = vsub.f32 %v311, %v320
    %v322 = vmax.f32 %v321, 0.0
    %v323 = vmul.f32 %v322, %v286
    %v324 = vadd.f32 %v319, %v323
    %325 = vst [vmem:[#allocation4] sm:$0xf] %v324
    %v326 = vld [vmem:[#allocation5] sm:$0xf]
    %s327 = sadd.f32 %s78, 1.0
    %v328 = vstv %s327
    %v329 = vsub.f32 %v328, %v277
    %v330 = vmax.f32 %v329, 0.0
    %v331 = vmul.f32 %v330, %v293
    %v332 = vadd.f32 %v326, %v331
    %333 = vst [vmem:[#allocation5] sm:$0xf] %v332
    %v334 = vld [vmem:[#allocation6] sm:$0xf]
    %v335 = vadd.f32 %v334, %v286
    %336 = vst [vmem:[#allocation6] sm:$0xf] %v335
    // Predicated region
    $region34: #{tpu_custom_call.1} parent=1 // pred_check
      %p337 = pneg %p79
    $region35: #{tpu_custom_call.1} parent=1 // pred_check_branch
      %339 = sbr.rel (%p337) target = $region37
    $region36: #{tpu_custom_call.1} parent=1 // pred_region
      %v340 = vlaneseq
      %v341 = vand.u32 %v340, 127
      %v342 = vld [vmem:[#allocation2] sm:$0xf]
      %vm343 = vcmask 1043456
      %v344 = vsel %vm343, %v342, 0.0
      %345 = vadd.xlane.f32.xlu0 %v344
      %v346 = vpop.xlane.xlu0 %345
      %v347 = vld [vmem:[#allocation3] sm:$0xf]
      %v348 = vsel %vm343, %v347, 0.0
      %349 = vadd.xlane.f32.xlu0 %v348
      %v350 = vpop.xlane.xlu0 %349
      %v351 = vld [vmem:[#allocation4] sm:$0xf]
      %v352 = vsel %vm343, %v351, 0.0
      %353 = vadd.xlane.f32.xlu0 %v352
      %v354 = vpop.xlane.xlu0 %353
      %v355 = vld [vmem:[#allocation5] sm:$0xf]
      %v356 = vsel %vm343, %v355, 0.0
      %357 = vadd.xlane.f32.xlu0 %v356
      %v358 = vpop.xlane.xlu0 %357
      %v359 = vld [vmem:[#allocation6] sm:$0xf]
      %v360 = vsel %vm343, %v359, 0.0
      %361 = vadd.xlane.f32.xlu0 %v360
      %v362 = vpop.xlane.xlu0 %361
      %vm363 = vcmp.eq.s32.totalorder %v341, 0
      %vm364 = vcmp.eq.s32.totalorder %v341, 1
      %vm365 = vcmp.eq.s32.totalorder %v341, 2
      %vm366 = vcmp.eq.s32.totalorder %v341, 3
      %vm367 = vcmp.eq.s32.totalorder %v341, 4
      %v368 = vsel %vm367, %v362, 0.0
      %v369 = vsel %vm366, %v358, %v368
      %v370 = vsel %vm365, %v354, %v369
      %v371 = vsel %vm364, %v350, %v370
      %v372 = vsel %vm363, %v346, %v371
      %373 = vst [vmem:[#allocation11] sm:$0xf] %v372
    $region37: #{tpu_custom_call.1} parent=1 // pred_fallthru
      _
    // Predicated region
    $region38: #{tpu_custom_call.1} parent=1 // pred_check
      _
    $region39: #{tpu_custom_call.1} parent=1 // pred_check_branch
      %375 = sbr.rel (0) target = $region41
    $region40: #{tpu_custom_call.1} parent=1 // pred_region
      %s376 = sadd.s32 0, 0
      %378 = vsyncadd [#allocation8], 0
      %s379 = smul.addr %s376, 8
      %s380 = scalar_lea.hbm %s6, %s379
      %s382 = sshll.u32 [#allocation10], 4
      %s383 = int_to_ptr.vmem [resolvable:$true] %s382
      %s384 = sshll.u32 %s380, 4
      %s385 = int_to_ptr.hbm [resolvable:$true] %s384
      %387 = dma.vmem_to_hbm [thread:$0]  %s383, 128, %s385, [#allocation8]
    $region41: #{tpu_custom_call.1} parent=1 // pred_fallthru
      _
    // Predicated region
    $region42: #{tpu_custom_call.1} parent=1 // pred_check
      _
    $region43: #{tpu_custom_call.1} parent=1 // pred_check_branch
      %389 = sbr.rel (0) target = $region45
    $region44: #{tpu_custom_call.1} parent=1 // pred_region
      %391 = vsyncadd [#allocation12], 0
      %s393 = sshll.u32 [#allocation11], 4
      %s394 = int_to_ptr.vmem [resolvable:$true] %s393
      %s395 = sshll.u32 %s7, 4
      %s396 = int_to_ptr.hbm [resolvable:$true] %s395
      %398 = dma.vmem_to_hbm [thread:$0]  %s394, 64, %s396, [#allocation12]
    $region45: #{tpu_custom_call.1} parent=1 // pred_fallthru
      _
    // Predicated region
    $region46: #{tpu_custom_call.1} parent=1 // pred_check
      _
    $region47: #{tpu_custom_call.1} parent=1 // pred_check_branch
      %400 = sbr.rel (0) target = $region49
    $region48: #{tpu_custom_call.1} parent=1 // pred_region
      %402 = dma.done [#allocation8], 128
    $region49: #{tpu_custom_call.1} parent=1 // pred_fallthru
      _
    // Predicated region
    $region50: #{tpu_custom_call.1} parent=1 // pred_check
      _
    $region51: #{tpu_custom_call.1} parent=1 // pred_check_branch
      %404 = sbr.rel (0) target = $region53
    $region52: #{tpu_custom_call.1} parent=1 // pred_region
      %406 = dma.done [#allocation12], 64
    $region53: #{tpu_custom_call.1} parent=1 // pred_fallthru
      _
    %407 = vsyncpa [#allocation8], 1
    %408 = vsyncpa [#allocation12], 1
    %409 = vsyncpa [#allocation9], 1

</llo_original>
